<compile_context>
chip_gen: v7x
topology: tpu7x:2x2x1
jax: 0.10.0
libtpu: 0.0.40
codegen_flags: <defaults>
</compile_context>

<pallas_src>
import jax
import jax.numpy as jnp
from jax.experimental import pallas as pl
from jax.experimental.pallas import tpu as pltpu

IN_F, HID_F, OUT_F = 20, 10, 10


def _fused_linear_kernel(x_ref, w_ref, b_ref, o_ref):
    # One MXU matmul per batch tile: (tb, 20) @ (20, 10), f32 accumulation.
    acc = jnp.dot(x_ref[...], w_ref[...], preferred_element_type=jnp.float32)
    o_ref[...] = (acc + b_ref[...]).astype(o_ref.dtype)


def fuse_net2_params(w1, b1, w2, b2):
    """Algebraic fusion of the two linears. Call ONCE at model init, not per step."""
    w_fused = w1.astype(jnp.float32) @ w2.astype(jnp.float32)                # (20, 10)
    b_fused = (b1.astype(jnp.float32) @ w2.astype(jnp.float32)
               + b2.astype(jnp.float32))                                     # (1, 10)
    return w_fused, b_fused


def net2_forward(x, w_fused, b_fused, *, block_b=16384):
    """Forward pass of Net2 as one fused, batch-tiled MXU matmul."""
    B, in_f = x.shape
    out_f = w_fused.shape[1]
    out_dtype = x.dtype

    # Weights participate at x's dtype (tiny cast, done on a 20x10 array);
    # bias stays f32 and is added to the f32 accumulator.
    w = w_fused.astype(x.dtype)
    b = b_fused.astype(jnp.float32)

    # Batch tile: multiple of 8 (16 for sub-32-bit x to respect bf16 tiling),
    # capped at ceil(B/2) so grid length stays >= 2 when the batch allows it.
    sub_mult = 8 if jnp.dtype(x.dtype).itemsize >= 4 else 16
    half = -(-B // 2)                                            # cdiv(B, 2)
    tb = min(block_b, max(sub_mult, -(-half // sub_mult) * sub_mult))
    tb = -(-tb // sub_mult) * sub_mult

    grid = (pl.cdiv(B, tb),)   # partial last block clamped by Pallas, no pad copy

    return pl.pallas_call(
        _fused_linear_kernel,
        out_shape=jax.ShapeDtypeStruct((B, out_f), out_dtype),
        grid_spec=pltpu.PrefetchScalarGridSpec(
            num_scalar_prefetch=0,
            grid=grid,
            in_specs=[
                pl.BlockSpec((tb, in_f), lambda i: (i, 0)),      # batch-tiled x
                pl.BlockSpec((in_f, out_f), lambda i: (0, 0)),   # resident fused W (full dims)
                pl.BlockSpec((1, out_f), lambda i: (0, 0)),      # resident fused b (full dims)
            ],
            out_specs=pl.BlockSpec((tb, out_f), lambda i: (i, 0)),  # unpadded (B, 10) output
        ),
        compiler_params=pltpu.CompilerParams(
            dimension_semantics=("parallel",),        # uses v7x's 2nd TC; harmless on v5e/v6e
            vmem_limit_bytes=32 << 20,                # safe on all generations
        ),
    )(x, w, b)


def init_params(key, in_f, hid_f, out_f, dtype=jnp.float32):
    # Deterministic init mimicking PyTorch nn.Linear default (uniform +-1/sqrt(fan_in)).
    k1, k2, k3, k4 = jax.random.split(key, 4)
    bound1 = 1.0 / jnp.sqrt(in_f)
    bound2 = 1.0 / jnp.sqrt(hid_f)
    w1 = jax.random.uniform(k1, (in_f, hid_f), dtype, -bound1, bound1)
    b1 = jax.random.uniform(k2, (1, hid_f), dtype, -bound1, bound1)
    w2 = jax.random.uniform(k3, (hid_f, out_f), dtype, -bound2, bound2)
    b2 = jax.random.uniform(k4, (1, out_f), dtype, -bound2, bound2)
    return w1, b1, w2, b2


if __name__ == "__main__":
    key = jax.random.PRNGKey(0)
    kx, kp = jax.random.split(key)

    B = 8
    x = jax.random.normal(kx, (B, IN_F), dtype=jnp.float32)
    w1, b1, w2, b2 = init_params(kp, IN_F, HID_F, OUT_F)

    # Fusion is done once at init (hoisted out of the step path).
    w_fused, b_fused = fuse_net2_params(w1, b1, w2, b2)

    # Small test case (single grid step).
    out = jax.block_until_ready(net2_forward(x, w_fused, b_fused))
    ref = (x @ w1 + b1) @ w2 + b2
    assert out.shape == (B, OUT_F)
    assert jnp.allclose(out, ref, atol=1e-4, rtol=1e-4)

    # Exercise the tiled + ragged (partial last block) path: B=100 -> tb=56, grid=2.
    B2 = 100
    x2 = jax.random.normal(jax.random.PRNGKey(1), (B2, IN_F), dtype=jnp.float32)
    out2 = jax.block_until_ready(net2_forward(x2, w_fused, b_fused))
    ref2 = (x2 @ w1 + b1) @ w2 + b2
    assert out2.shape == (B2, OUT_F)
    assert jnp.allclose(out2, ref2, atol=1e-4, rtol=1e-4)

    print("KERNEL_OK")
</pallas_src>

<mosaic_0001>
module attributes {stable_mosaic.version = 11 : i64} {
  func.func @_fused_linear_kernel(%arg0: i32, %arg1: memref<8x20xf32, #tpu.memory_space<vmem>>, %arg2: memref<20x10xf32, #tpu.memory_space<vmem>>, %arg3: memref<1x10xf32, #tpu.memory_space<vmem>>, %arg4: memref<8x10xf32, #tpu.memory_space<vmem>>) attributes {dimension_semantics = [#tpu.dimension_semantics<parallel>], iteration_bounds = array<i64: 1>, scalar_prefetch = 0 : i64, scratch_operands = 0 : i64, tpu.core_type = #tpu.core_type<tc>, window_params = [{transform_indices = @transform_0, window_bounds = array<i64: 8, 20>}, {pipeline_mode = #tpu.pipeline_mode<synchronous>, transform_indices = @transform_1, window_bounds = array<i64: 20, 10>}, {pipeline_mode = #tpu.pipeline_mode<synchronous>, transform_indices = @transform_2, window_bounds = array<i64: 1, 10>}, {transform_indices = @transform_3, window_bounds = array<i64: 8, 10>}]} {
    %c0 = arith.constant 0 : index
    %c0_0 = arith.constant 0 : index
    %0 = vector.load %arg1[%c0, %c0_0] : memref<8x20xf32, #tpu.memory_space<vmem>>, vector<8x20xf32>
    %c0_1 = arith.constant 0 : index
    %c0_2 = arith.constant 0 : index
    %1 = vector.load %arg2[%c0_1, %c0_2] : memref<20x10xf32, #tpu.memory_space<vmem>>, vector<20x10xf32>
    %cst = arith.constant dense<0.000000e+00> : vector<8x10xf32>
    %2 = tpu.matmul %0, %1, %cst {dimension_numbers = #tpu.dot_dimension_numbers<[1], [0], [0], [1], [0, 0, 1, 1], [], []>} : vector<8x20xf32>, vector<20x10xf32>, vector<8x10xf32> -> vector<8x10xf32>
    %c0_3 = arith.constant 0 : index
    %c0_4 = arith.constant 0 : index
    %3 = vector.load %arg3[%c0_3, %c0_4] : memref<1x10xf32, #tpu.memory_space<vmem>>, vector<1x10xf32>
    %4 = vector.broadcast %3 : vector<1x10xf32> to vector<8x10xf32>
    %5 = arith.addf %2, %4 : vector<8x10xf32>
    %c0_5 = arith.constant 0 : index
    %c0_6 = arith.constant 0 : index
    %6 = vector.load %arg4[%c0_5, %c0_6] : memref<8x10xf32, #tpu.memory_space<vmem>>, vector<8x10xf32>
    tpu.vector_store %arg4[%c0_5, %c0_6], %5 {strides = array<i32>} : memref<8x10xf32, #tpu.memory_space<vmem>>, vector<8x10xf32>,
    return
  }
  func.func @transform_0(%arg0: i32) -> (i32, i32) {
    %c0_i32 = arith.constant 0 : i32
    %c0_i32_0 = arith.constant 0 : i32
    return %arg0, %c0_i32 : i32, i32
  }
  func.func @transform_1(%arg0: i32) -> (i32, i32) {
    %c0_i32 = arith.constant 0 : i32
    %c0_i32_0 = arith.constant 0 : i32
    %c0_i32_1 = arith.constant 0 : i32
    return %c0_i32, %c0_i32_0 : i32, i32
  }
  func.func @transform_2(%arg0: i32) -> (i32, i32) {
    %c0_i32 = arith.constant 0 : i32
    %c0_i32_0 = arith.constant 0 : i32
    %c0_i32_1 = arith.constant 0 : i32
    return %c0_i32, %c0_i32_0 : i32, i32
  }
  func.func @transform_3(%arg0: i32) -> (i32, i32) {
    %c0_i32 = arith.constant 0 : i32
    %c0_i32_0 = arith.constant 0 : i32
    return %arg0, %c0_i32 : i32, i32
  }
}

</mosaic_0001>

<llo_original>
// kernel: tpu_custom_call.1
$region0: #{tpu_custom_call.1}
  #allocation0 [shape = 'u32[]', space=smem, size = 0x4, offset = 0x4, fixed_abs, tag = 'smem constant byte address 0x4 - core index']
  #allocation1 [shape = 'u32[144,128]{1,0:T(1,128)}', space=vmem, size = 0x12000, scoped, tag = 'internal scratch']
  %s0 = inlined_call_operand.vmem [shape: f32[8,20], index: 0, kind: input, shape index: {}]
  %s1 = inlined_call_operand.vmem [shape: f32[20,10], index: 1, kind: input, shape index: {}]
  %s2 = inlined_call_operand.vmem [shape: f32[1,10], index: 2, kind: input, shape index: {}]
  %s3 = inlined_call_operand.hbm [shape: f32[8,10], index: 3, kind: output, shape index: {}]
  %s4 = sld [smem:[#allocation0]]
  $region22: #{tpu_custom_call.1} parent=0
    _
  %s6 = ssub.s32 1, %s4
  %s7 = scalar_select 0, %s6, %s4
  $region1: #{tpu_custom_call.1} parent=0
    #allocation2 [shape = 'u8[4096]{0}', space=vmem, size = 0x1000, scoped, tag = 'output window, operand 0, single buffered']
    #allocation3 [shape = 's32[1]{0}', space=sflag, size = 0x4, scoped, tag = 'scoped memory for tpu_custom_call.1']
    %8 = vsyncpa [#allocation3], 0
    // Predicated region
    $region2: #{tpu_custom_call.1} parent=1 // pred_check
      _
    $region3: #{tpu_custom_call.1} parent=1 // pred_check_branch
      %10 = sbr.rel (0) target = $region5
    $region4: #{tpu_custom_call.1} parent=1 // pred_region
      _
    $region5: #{tpu_custom_call.1} parent=1 // pred_fallthru
      _
    // Predicated region
    $region6: #{tpu_custom_call.1} parent=1 // pred_check
      _
    $region7: #{tpu_custom_call.1} parent=1 // pred_check_branch
      %12 = sbr.rel (0) target = $region9
    $region8: #{tpu_custom_call.1} parent=1 // pred_region
      _
    $region9: #{tpu_custom_call.1} parent=1 // pred_fallthru
      _
    // Predicated region
    $region10: #{tpu_custom_call.1} parent=1 // pred_check
      _
    $region11: #{tpu_custom_call.1} parent=1 // pred_check_branch
      %14 = sbr.rel (0) target = $region13
    $region12: #{tpu_custom_call.1} parent=1 // pred_region
      _
    $region13: #{tpu_custom_call.1} parent=1 // pred_fallthru
      _
    %v15 = vld [vmem:[%s0] sm:$0xff]
    %v16 = vld [vmem:[%s1] sm:$0xff]
    %v17 = vld [vmem:[%s1 + $0x8] sm:$0xff]
    %v18 = vld [vmem:[%s1 + $0x10] sm:$0xf]
    %v19 = vld [vmem:[%s2] sm:$0x1]
    %v21 = vlaneseq
    %v22 = vshrl.u32 %v21, 7
    %v23 = vsub.s32 0, %v22
    %v24 = vrot.slane %v19, %v23
    %vm26 = vcmask 162816
    %v28 = vsel %vm26, %v15, 0
    %vm30 = vcmask 1043456
    %v32 = vsel %vm30, %v18, 0
    %34 = vmatprep.subr.mxu0 0.0
    %35 = vmatpush1.msra.mxu0 %v16
    %36 = vmatprep.subr.mxu0 0.0
    %37 = vmatpush1.msra.mxu0 %v17
    %38 = vmatprep.subr.mxu0 0.0
    %39 = vmatpush1.msra.mxu0 %v32
    %40 = vmatprep.subr.mxu0 0.0
    %41 = vmatpush1.msra.mxu0 0.0
    %42 = vmatprep.subr.mxu0 0.0
    %43 = vmatpush1.msra.mxu0 0.0
    %44 = vmatprep.subr.mxu0 0.0
    %45 = vmatpush1.msra.mxu0 0.0
    %46 = vmatprep.subr.mxu0 0.0
    %47 = vmatpush1.msra.mxu0 0.0
    %48 = vmatprep.subr.mxu0 0.0
    %49 = vmatpush1.msra.mxu0 0.0
    %50 = vmatprep.subr.mxu0 0.0
    %51 = vmatpush1.msra.mxu0 0.0
    %52 = vmatprep.subr.mxu0 0.0
    %53 = vmatpush1.msra.mxu0 0.0
    %54 = vmatprep.subr.mxu0 0.0
    %55 = vmatpush1.msra.mxu0 0.0
    %56 = vmatprep.subr.mxu0 0.0
    %57 = vmatpush1.msra.mxu0 0.0
    %58 = vmatprep.subr.mxu0 0.0
    %59 = vmatpush1.msra.mxu0 0.0
    %60 = vmatprep.subr.mxu0 0.0
    %61 = vmatpush1.msra.mxu0 0.0
    %62 = vmatprep.subr.mxu0 0.0
    %63 = vmatpush1.msra.mxu0 0.0
    %64 = vmatprep.subr.mxu0 0.0
    %65 = vmatpush1.msra.mxu0 0.0
    %66 = vmatprep.subr.mxu0 0.0
    %67 = vmatpush1.msra.mxu0 0.0
    %68 = vmatprep.subr.mxu0 0.0
    %69 = vmatpush1.msra.mxu0 0.0
    %70 = vmatprep.subr.mxu0 0.0
    %71 = vmatpush1.msra.mxu0 0.0
    %72 = vmatprep.subr.mxu0 0.0
    %73 = vmatpush1.msra.mxu0 0.0
    %74 = vmatprep.subr.mxu0 0.0
    %75 = vmatpush1.msra.mxu0 0.0
    %76 = vmatprep.subr.mxu0 0.0
    %77 = vmatpush1.msra.mxu0 0.0
    %78 = vmatprep.subr.mxu0 0.0
    %79 = vmatpush1.msra.mxu0 0.0
    %80 = vmatprep.subr.mxu0 0.0
    %81 = vmatpush1.msra.mxu0 0.0
    %82 = vmatprep.subr.mxu0 0.0
    %83 = vmatpush1.msra.mxu0 0.0
    %84 = vmatprep.subr.mxu0 0.0
    %85 = vmatpush1.msra.mxu0 0.0
    %86 = vmatprep.subr.mxu0 0.0
    %87 = vmatpush1.msra.mxu0 0.0
    %88 = vmatprep.subr.mxu0 0.0
    %89 = vmatpush1.msra.mxu0 0.0
    %90 = vmatprep.subr.mxu0 0.0
    %91 = vmatpush1.msra.mxu0 0.0
    %92 = vmatprep.subr.mxu0 0.0
    %93 = vmatpush1.msra.mxu0 0.0
    %94 = vmatprep.subr.mxu0 0.0
    %95 = vmatpush1.msra.mxu0 0.0
    %96 = vmatprep.subr.mxu0 0.0
    %97 = vmatpush1.msra.mxu0 0.0
    %98 = vmatprep.mubr.f32.mxu0 0.0
    %99 = vmatmul.mubr.f32.gmra.mrb[0].mxu0 %v28
    %v100 = vpop.f32.mrb[0].mxu0
    %v101 = vadd.f32 %v24, %v100
    %v102 = vpop.f32.mrb[0].mxu0
    %103 = vdwg.mxu0
    %vm104 = vcmask 80896
    %105 = vst.msk [vmem:[#allocation2] sm:$0xff] %vm104, %v101
    // Predicated region
    $region14: #{tpu_custom_call.1} parent=1 // pred_check
      _
    $region15: #{tpu_custom_call.1} parent=1 // pred_check_branch
      %107 = sbr.rel (0) target = $region17
    $region16: #{tpu_custom_call.1} parent=1 // pred_region
      %s109 = ssub.s32 128, 128
      %110 = vsyncadd [#allocation3], %s109
      %s112 = sshll.u32 [#allocation2], 4
      %s113 = int_to_ptr.vmem [resolvable:$true] %s112
      %115 = dma.vmem_to_hbm [thread:$0]  %s113, 128, %s3, [#allocation3]
    $region17: #{tpu_custom_call.1} parent=1 // pred_fallthru
      _
    // Predicated region
    $region18: #{tpu_custom_call.1} parent=1 // pred_check
      _
    $region19: #{tpu_custom_call.1} parent=1 // pred_check_branch
      %117 = sbr.rel (0) target = $region21
    $region20: #{tpu_custom_call.1} parent=1 // pred_region
      %118 = dma.done [#allocation3], 128
    $region21: #{tpu_custom_call.1} parent=1 // pred_fallthru
      _
    %119 = vsyncpa [#allocation3], 1

</llo_original>
